<compile_context>
chip_gen: v7x
topology: tpu7x:2x2x1
jax: 0.10.0
libtpu: 0.0.40
codegen_flags: <defaults>
</compile_context>

<pallas_src>
import functools

import jax
import jax.numpy as jnp
from jax.experimental import pallas as pl
from jax.experimental.pallas import tpu as pltpu

LEAKY_SLOPE = 0.01  # torch.nn.LeakyReLU default negative_slope


def _round_up(n, m):
    return ((n + m - 1) // m) * m


def moe_kernel(x_ref, w_ref, b_ref, out_ref, *, exp_num, exp_dim, gate_off):
    """One batch tile: single fused MXU matmul + f32 VPU epilogue."""
    E, H = exp_num, exp_dim
    EH = E * H

    # Single fused matmul: (tb, D) x (D, N_pad) -> (tb, N_pad), f32 accumulate.
    fused = jnp.dot(x_ref[...], w_ref[...],
                    preferred_element_type=jnp.float32)
    fused = fused + b_ref[...].astype(jnp.float32)            # (1, N_pad) bcast

    # Expert pre-activations + LeakyReLU (lane-dense [0, E*H) slab).
    h = fused[:, 0:EH]
    h = jnp.where(h >= 0, h, LEAKY_SLOPE * h)

    # Gate softmax in replicated space: each expert logit appears H times, so
    #   sum_lanes(exp) = H * sum_e(exp)  and  softmax_e = exp * H / sum_lanes.
    logits = fused[:, gate_off:gate_off + EH]
    logits = logits - jnp.max(logits, axis=-1, keepdims=True)
    p = jnp.exp(logits)
    denom = jnp.sum(p, axis=-1, keepdims=True)                # = H * sum_e exp
    gate_rep = p * (float(H) * pl.reciprocal(denom, approx=False))

    # Gate-weighted sum over experts: single elementwise multiply, then
    # E static lane-slice adds (no per-iteration broadcasts).
    weighted = gate_rep * h                                    # (tb, E*H)
    acc = weighted[:, 0:H]
    for e in range(1, E):
        acc = acc + weighted[:, e * H:(e + 1) * H]
    out_ref[...] = acc.astype(out_ref.dtype)


def moe_forward(x, gate_w, gate_b, exp_w, exp_b, *, block_b=512):
    """x: (B, D); gate_w: (D, E); gate_b: (E,); exp_w: (E, D, H); exp_b: (E, H)."""
    B, D = x.shape
    E = gate_w.shape[1]
    H = exp_w.shape[2]
    EH = E * H

    # ---- host-side fused, 128-lane-aligned weight / bias construction ----
    gate_off = _round_up(EH, 128)            # gate section starts tile-aligned
    n_pad = _round_up(gate_off + EH, 128)    # fused width, multiple of 128
    # (for E=4, H=32 this is exactly 256 -> one v6e/v7x MXU column tile)

    w_exp = exp_w.transpose(1, 0, 2).reshape(D, EH)            # col e*H+h = exp_w[e,:,h]
    w_gate_rep = jnp.repeat(gate_w, H, axis=1)                 # (D, E*H)
    w_fused = jnp.zeros((D, n_pad), dtype=exp_w.dtype)
    w_fused = w_fused.at[:, 0:EH].set(w_exp)
    w_fused = w_fused.at[:, gate_off:gate_off + EH].set(
        w_gate_rep.astype(exp_w.dtype))

    b_gate_rep = jnp.repeat(gate_b.reshape(1, E), H, axis=1)   # (1, E*H)
    b_fused = jnp.zeros((1, n_pad), dtype=jnp.float32)         # bias stays f32
    b_fused = b_fused.at[:, 0:EH].set(exp_b.reshape(1, EH).astype(jnp.float32))
    b_fused = b_fused.at[:, gate_off:gate_off + EH].set(
        b_gate_rep.astype(jnp.float32))

    # Batch tiling: full batch per tile when small, otherwise 512-row tiles on
    # a parallel grid axis (megacore sharding on v7x, pipelined DMA elsewhere).
    tb = B if B <= block_b else block_b
    grid = (pl.cdiv(B, tb),)

    kernel = functools.partial(
        moe_kernel, exp_num=E, exp_dim=H, gate_off=gate_off)
    return pl.pallas_call(
        kernel,
        out_shape=jax.ShapeDtypeStruct((B, H), x.dtype),
        grid_spec=pltpu.PrefetchScalarGridSpec(
            num_scalar_prefetch=0,
            grid=grid,
            in_specs=[
                pl.BlockSpec((tb, D), lambda i: (i, 0)),        # batch-tiled x
                pl.BlockSpec((D, n_pad), lambda i: (0, 0)),     # resident weights
                pl.BlockSpec((1, n_pad), lambda i: (0, 0)),     # resident bias
            ],
            out_specs=pl.BlockSpec((tb, H), lambda i: (i, 0)),
        ),
        compiler_params=pltpu.CompilerParams(
            dimension_semantics=("parallel",)),
    )(x, w_fused, b_fused)


def moe_reference(x, gate_w, gate_b, exp_w, exp_b):
    """Pure-JAX reference mirroring the PyTorch forward."""
    gate = jax.nn.softmax(x @ gate_w + gate_b, axis=-1)           # (B, E)
    experts = jnp.einsum("bd,edh->beh", x, exp_w) + exp_b[None]   # (B, E, H)
    experts = jnp.where(experts >= 0, experts, LEAKY_SLOPE * experts)
    return jnp.einsum("be,beh->bh", gate, experts)                # (B, H)


if __name__ == "__main__":
    # Small shapes consistent with the module: exp_num=4, exp_dim=32, inp_dim=32.
    B, D, E, H = 8, 32, 4, 32

    key = jax.random.PRNGKey(0)
    kx, kgw, kgb, kew, keb = jax.random.split(key, 5)

    x = jax.random.normal(kx, (B, D), dtype=jnp.float32)
    gate_w = jax.random.normal(kgw, (D, E), dtype=jnp.float32) * 0.1
    gate_b = jax.random.normal(kgb, (E,), dtype=jnp.float32) * 0.1
    exp_w = jax.random.normal(kew, (E, D, H), dtype=jnp.float32) * 0.1
    exp_b = jax.random.normal(keb, (E, H), dtype=jnp.float32) * 0.1

    out = moe_forward(x, gate_w, gate_b, exp_w, exp_b)
    out = jax.block_until_ready(out)

    ref = moe_reference(x, gate_w, gate_b, exp_w, exp_b)
    assert out.shape == (B, H)
    assert jnp.allclose(out, ref, atol=1e-5, rtol=1e-5)

    print("KERNEL_OK")
</pallas_src>

<mosaic_0001>
module attributes {stable_mosaic.version = 11 : i64} {
  func.func @moe_kernel(%arg0: i32, %arg1: memref<8x32xf32, #tpu.memory_space<vmem>>, %arg2: memref<32x256xf32, #tpu.memory_space<vmem>>, %arg3: memref<1x256xf32, #tpu.memory_space<vmem>>, %arg4: memref<8x32xf32, #tpu.memory_space<vmem>>) attributes {dimension_semantics = [#tpu.dimension_semantics<parallel>], iteration_bounds = array<i64: 1>, scalar_prefetch = 0 : i64, scratch_operands = 0 : i64, tpu.core_type = #tpu.core_type<tc>, window_params = [{transform_indices = @transform_0, window_bounds = array<i64: 8, 32>}, {pipeline_mode = #tpu.pipeline_mode<synchronous>, transform_indices = @transform_1, window_bounds = array<i64: 32, 256>}, {pipeline_mode = #tpu.pipeline_mode<synchronous>, transform_indices = @transform_2, window_bounds = array<i64: 1, 256>}, {transform_indices = @transform_3, window_bounds = array<i64: 8, 32>}]} {
    %c0 = arith.constant 0 : index
    %c0_0 = arith.constant 0 : index
    %0 = vector.load %arg1[%c0, %c0_0] : memref<8x32xf32, #tpu.memory_space<vmem>>, vector<8x32xf32>
    %c0_1 = arith.constant 0 : index
    %c0_2 = arith.constant 0 : index
    %1 = vector.load %arg2[%c0_1, %c0_2] : memref<32x256xf32, #tpu.memory_space<vmem>>, vector<32x256xf32>
    %cst = arith.constant dense<0.000000e+00> : vector<8x256xf32>
    %2 = tpu.matmul %0, %1, %cst {dimension_numbers = #tpu.dot_dimension_numbers<[1], [0], [0], [1], [0, 0, 1, 1], [], []>} : vector<8x32xf32>, vector<32x256xf32>, vector<8x256xf32> -> vector<8x256xf32>
    %c0_3 = arith.constant 0 : index
    %c0_4 = arith.constant 0 : index
    %3 = vector.load %arg3[%c0_3, %c0_4] : memref<1x256xf32, #tpu.memory_space<vmem>>, vector<1x256xf32>
    %4 = vector.broadcast %3 : vector<1x256xf32> to vector<8x256xf32>
    %5 = arith.addf %2, %4 : vector<8x256xf32>
    %6 = vector.extract_strided_slice %5 {offsets = [0, 0], sizes = [8, 128], strides = [1, 1]} : vector<8x256xf32> to vector<8x128xf32>
    %cst_5 = arith.constant 0.000000e+00 : f32
    %7 = vector.broadcast %cst_5 : f32 to vector<8x128xf32>
    %8 = arith.cmpf oge, %6, %7 : vector<8x128xf32>
    %cst_6 = arith.constant 0.00999999977 : f32
    %9 = vector.broadcast %cst_6 : f32 to vector<8x128xf32>
    %10 = arith.mulf %9, %6 : vector<8x128xf32>
    %11 = arith.select %8, %6, %10 : vector<8x128xi1>, vector<8x128xf32>
    %12 = vector.extract_strided_slice %5 {offsets = [0, 128], sizes = [8, 128], strides = [1, 1]} : vector<8x256xf32> to vector<8x128xf32>
    %cst_7 = arith.constant dense<0xFF800000> : vector<8xf32>
    %13 = vector.multi_reduction <maximumf>, %12, %cst_7 [1] : vector<8x128xf32> to vector<8xf32>
    %14 = vector.shape_cast %13 : vector<8xf32> to vector<8x1xf32>
    %15 = vector.broadcast %14 : vector<8x1xf32> to vector<8x128xf32>
    %16 = arith.subf %12, %15 : vector<8x128xf32>
    %17 = math.exp %16 : vector<8x128xf32>
    %cst_8 = arith.constant dense<0.000000e+00> : vector<8xf32>
    %18 = vector.multi_reduction <add>, %17, %cst_8 [1] : vector<8x128xf32> to vector<8xf32>
    %19 = vector.shape_cast %18 : vector<8xf32> to vector<8x1xf32>
    %20 = tpu.reciprocal %19 : vector<8x1xf32> -> vector<8x1xf32>
    %cst_9 = arith.constant 3.200000e+01 : f32
    %21 = vector.broadcast %cst_9 : f32 to vector<8x1xf32>
    %22 = arith.mulf %21, %20 : vector<8x1xf32>
    %23 = vector.broadcast %22 : vector<8x1xf32> to vector<8x128xf32>
    %24 = arith.mulf %17, %23 : vector<8x128xf32>
    %25 = arith.mulf %24, %11 : vector<8x128xf32>
    %26 = vector.extract_strided_slice %25 {offsets = [0, 0], sizes = [8, 32], strides = [1, 1]} : vector<8x128xf32> to vector<8x32xf32>
    %27 = vector.extract_strided_slice %25 {offsets = [0, 32], sizes = [8, 32], strides = [1, 1]} : vector<8x128xf32> to vector<8x32xf32>
    %28 = arith.addf %26, %27 : vector<8x32xf32>
    %29 = vector.extract_strided_slice %25 {offsets = [0, 64], sizes = [8, 32], strides = [1, 1]} : vector<8x128xf32> to vector<8x32xf32>
    %30 = arith.addf %28, %29 : vector<8x32xf32>
    %31 = vector.extract_strided_slice %25 {offsets = [0, 96], sizes = [8, 32], strides = [1, 1]} : vector<8x128xf32> to vector<8x32xf32>
    %32 = arith.addf %30, %31 : vector<8x32xf32>
    %c0_10 = arith.constant 0 : index
    %c0_11 = arith.constant 0 : index
    %33 = vector.load %arg4[%c0_10, %c0_11] : memref<8x32xf32, #tpu.memory_space<vmem>>, vector<8x32xf32>
    tpu.vector_store %arg4[%c0_10, %c0_11], %32 {strides = array<i32>} : memref<8x32xf32, #tpu.memory_space<vmem>>, vector<8x32xf32>,
    return
  }
  func.func @transform_0(%arg0: i32) -> (i32, i32) {
    %c0_i32 = arith.constant 0 : i32
    %c0_i32_0 = arith.constant 0 : i32
    return %arg0, %c0_i32 : i32, i32
  }
  func.func @transform_1(%arg0: i32) -> (i32, i32) {
    %c0_i32 = arith.constant 0 : i32
    %c0_i32_0 = arith.constant 0 : i32
    %c0_i32_1 = arith.constant 0 : i32
    return %c0_i32, %c0_i32_0 : i32, i32
  }
  func.func @transform_2(%arg0: i32) -> (i32, i32) {
    %c0_i32 = arith.constant 0 : i32
    %c0_i32_0 = arith.constant 0 : i32
    %c0_i32_1 = arith.constant 0 : i32
    return %c0_i32, %c0_i32_0 : i32, i32
  }
  func.func @transform_3(%arg0: i32) -> (i32, i32) {
    %c0_i32 = arith.constant 0 : i32
    %c0_i32_0 = arith.constant 0 : i32
    return %arg0, %c0_i32 : i32, i32
  }
}

</mosaic_0001>

<llo_original>
// kernel: tpu_custom_call.1
$region0: #{tpu_custom_call.1}
  #allocation0 [shape = 'u32[]', space=smem, size = 0x4, offset = 0x4, fixed_abs, tag = 'smem constant byte address 0x4 - core index']
  #allocation1 [shape = 'u32[144,128]{1,0:T(1,128)}', space=vmem, size = 0x12000, scoped, tag = 'internal scratch']
  %s0 = inlined_call_operand.hbm [shape: f32[8,32], index: 0, kind: input, shape index: {}]
  %s1 = inlined_call_operand.hbm [shape: f32[32,256], index: 1, kind: input, shape index: {}]
  %s2 = inlined_call_operand.vmem [shape: f32[1,256], index: 2, kind: input, shape index: {}]
  %s3 = inlined_call_operand.hbm [shape: f32[8,32], index: 3, kind: output, shape index: {}]
  %s4 = sld [smem:[#allocation0]]
  $region30: #{tpu_custom_call.1} parent=0
    _
  %s6 = ssub.s32 1, %s4
  %s7 = scalar_select 0, %s6, %s4
  $region1: #{tpu_custom_call.1} parent=0
    #allocation2 [shape = 'u8[4096]{0}', space=vmem, size = 0x1000, scoped, tag = 'input window, operand 0, single buffered']
    #allocation3 [shape = 's32[1]{0}', space=sflag, size = 0x4, scoped, tag = 'scoped memory for tpu_custom_call.1']
    #allocation4 [shape = 's32[1]{0}', space=sflag, size = 0x4, scoped, tag = 'scoped memory for tpu_custom_call.1']
    #allocation5 [shape = 'u8[32768]{0}', space=vmem, size = 0x8000, scoped, tag = 'input window, operand 1, single buffered']
    #allocation6 [shape = 's32[1]{0}', space=sflag, size = 0x4, scoped, tag = 'scoped memory for tpu_custom_call.1']
    #allocation7 [shape = 'u8[4096]{0}', space=vmem, size = 0x1000, scoped, tag = 'output window, operand 0, single buffered']
    %8 = vsyncpa [#allocation3], 0
    %9 = vsyncpa [#allocation6], 0
    %10 = vsyncpa [#allocation4], 0
    // Predicated region
    $region2: #{tpu_custom_call.1} parent=1 // pred_check
      _
    $region3: #{tpu_custom_call.1} parent=1 // pred_check_branch
      %12 = sbr.rel (0) target = $region5
    $region4: #{tpu_custom_call.1} parent=1 // pred_region
      %s14 = ssub.s32 128, 128
      %15 = vsyncadd [#allocation3], %s14
      %s17 = sshll.u32 [#allocation2], 4
      %s18 = int_to_ptr.vmem [resolvable:$true] %s17
      %20 = dma.hbm_to_vmem [thread:$0]  %s0, 128, %s18, [#allocation3]
    $region5: #{tpu_custom_call.1} parent=1 // pred_fallthru
      _
    // Predicated region
    $region6: #{tpu_custom_call.1} parent=1 // pred_check
      _
    $region7: #{tpu_custom_call.1} parent=1 // pred_check_branch
      %22 = sbr.rel (0) target = $region9
    $region8: #{tpu_custom_call.1} parent=1 // pred_region
      %s24 = ssub.s32 1024, 1024
      %25 = vsyncadd [#allocation6], %s24
      %s26 = sshll.u32 [#allocation5], 4
      %s27 = int_to_ptr.vmem [resolvable:$true] %s26
      %32 = dma.hbm_to_vmem [thread:$0]  %s1, 1024, %s27, [#allocation6], 256, 256, 16
    $region9: #{tpu_custom_call.1} parent=1 // pred_fallthru
      _
    // Predicated region
    $region10: #{tpu_custom_call.1} parent=1 // pred_check
      _
    $region11: #{tpu_custom_call.1} parent=1 // pred_check_branch
      %34 = sbr.rel (0) target = $region13
    $region12: #{tpu_custom_call.1} parent=1 // pred_region
      _
    $region13: #{tpu_custom_call.1} parent=1 // pred_fallthru
      _
    // Predicated region
    $region14: #{tpu_custom_call.1} parent=1 // pred_check
      _
    $region15: #{tpu_custom_call.1} parent=1 // pred_check_branch
      %36 = sbr.rel (0) target = $region17
    $region16: #{tpu_custom_call.1} parent=1 // pred_region
      %37 = dma.done [#allocation3], 128
    $region17: #{tpu_custom_call.1} parent=1 // pred_fallthru
      _
    // Predicated region
    $region18: #{tpu_custom_call.1} parent=1 // pred_check
      _
    $region19: #{tpu_custom_call.1} parent=1 // pred_check_branch
      %39 = sbr.rel (0) target = $region21
    $region20: #{tpu_custom_call.1} parent=1 // pred_region
      %40 = dma.done [#allocation6], 1024
    $region21: #{tpu_custom_call.1} parent=1 // pred_fallthru
      _
    %v41 = vld [vmem:[#allocation2] sm:$0xff]
    %v42 = vld [vmem:[#allocation5] sm:$0xff]
    %v43 = vld [vmem:[#allocation5 + $0x8] sm:$0xff]
    %v44 = vld [vmem:[#allocation5 + $0x10] sm:$0xff]
    %v45 = vld [vmem:[#allocation5 + $0x18] sm:$0xff]
    %v46 = vld [vmem:[#allocation5 + $0x20] sm:$0xff]
    %v47 = vld [vmem:[#allocation5 + $0x28] sm:$0xff]
    %v48 = vld [vmem:[#allocation5 + $0x30] sm:$0xff]
    %v49 = vld [vmem:[#allocation5 + $0x38] sm:$0xff]
    %v50 = vld [vmem:[%s2] sm:$0x3]
    %v52 = vlaneseq
    %v53 = vshrl.u32 %v52, 7
    %v54 = vsub.s32 0, %v53
    %v55 = vrot.slane %v50, %v54
    %v56 = vlaneseq
    %v57 = vshrl.u32 %v56, 7
    %v58 = vsub.s32 1, %v57
    %v59 = vrot.slane %v50, %v58
    %vm62 = vcmask 261120
    %v64 = vsel %vm62, %v41, 0
    %66 = vmatprep.subr.mxu0 %v43
    %67 = vmatpush1.msra.mxu0 %v42
    %68 = vmatprep.subr.mxu0 %v45
    %69 = vmatpush1.msra.mxu0 %v44
    %70 = vmatprep.subr.mxu0 %v47
    %71 = vmatpush1.msra.mxu0 %v46
    %72 = vmatprep.subr.mxu0 %v49
    %73 = vmatpush1.msra.mxu0 %v48
    %74 = vmatprep.subr.mxu0 0.0
    %75 = vmatpush1.msra.mxu0 0.0
    %76 = vmatprep.subr.mxu0 0.0
    %77 = vmatpush1.msra.mxu0 0.0
    %78 = vmatprep.subr.mxu0 0.0
    %79 = vmatpush1.msra.mxu0 0.0
    %80 = vmatprep.subr.mxu0 0.0
    %81 = vmatpush1.msra.mxu0 0.0
    %82 = vmatprep.subr.mxu0 0.0
    %83 = vmatpush1.msra.mxu0 0.0
    %84 = vmatprep.subr.mxu0 0.0
    %85 = vmatpush1.msra.mxu0 0.0
    %86 = vmatprep.subr.mxu0 0.0
    %87 = vmatpush1.msra.mxu0 0.0
    %88 = vmatprep.subr.mxu0 0.0
    %89 = vmatpush1.msra.mxu0 0.0
    %90 = vmatprep.subr.mxu0 0.0
    %91 = vmatpush1.msra.mxu0 0.0
    %92 = vmatprep.subr.mxu0 0.0
    %93 = vmatpush1.msra.mxu0 0.0
    %94 = vmatprep.subr.mxu0 0.0
    %95 = vmatpush1.msra.mxu0 0.0
    %96 = vmatprep.subr.mxu0 0.0
    %97 = vmatpush1.msra.mxu0 0.0
    %98 = vmatprep.subr.mxu0 0.0
    %99 = vmatpush1.msra.mxu0 0.0
    %100 = vmatprep.subr.mxu0 0.0
    %101 = vmatpush1.msra.mxu0 0.0
    %102 = vmatprep.subr.mxu0 0.0
    %103 = vmatpush1.msra.mxu0 0.0
    %104 = vmatprep.subr.mxu0 0.0
    %105 = vmatpush1.msra.mxu0 0.0
    %106 = vmatprep.subr.mxu0 0.0
    %107 = vmatpush1.msra.mxu0 0.0
    %108 = vmatprep.subr.mxu0 0.0
    %109 = vmatpush1.msra.mxu0 0.0
    %110 = vmatprep.subr.mxu0 0.0
    %111 = vmatpush1.msra.mxu0 0.0
    %112 = vmatprep.subr.mxu0 0.0
    %113 = vmatpush1.msra.mxu0 0.0
    %114 = vmatprep.subr.mxu0 0.0
    %115 = vmatpush1.msra.mxu0 0.0
    %116 = vmatprep.subr.mxu0 0.0
    %117 = vmatpush1.msra.mxu0 0.0
    %118 = vmatprep.subr.mxu0 0.0
    %119 = vmatpush1.msra.mxu0 0.0
    %120 = vmatprep.subr.mxu0 0.0
    %121 = vmatpush1.msra.mxu0 0.0
    %122 = vmatprep.subr.mxu0 0.0
    %123 = vmatpush1.msra.mxu0 0.0
    %124 = vmatprep.subr.mxu0 0.0
    %125 = vmatpush1.msra.mxu0 0.0
    %126 = vmatprep.subr.mxu0 0.0
    %127 = vmatpush1.msra.mxu0 0.0
    %128 = vmatprep.subr.mxu0 0.0
    %129 = vmatpush1.msra.mxu0 0.0
    %130 = vmatprep.mubr.f32.mxu0 0.0
    %131 = vmatmul.mubr.f32.gmra.mrb[0].mxu0 %v64
    %v132 = vpop.f32.mrb[0].mxu0
    %v133 = vadd.f32 %v55, %v132
    %v134 = vpop.f32.mrb[0].mxu0
    %v135 = vadd.f32 %v59, %v134
    %136 = vdwg.mxu0
    %vm137 = vcmp.ge.f32.partialorder %v133, 0.0
    %v138 = vmul.f32 %v133, 0.01
    %v139 = vsel %vm137, %v133, %v138
    %140 = vmax.xlane.f32.xlu0 %v135
    %v141 = vpop.xlane.xlu0 %140
    %v142 = vsub.f32 %v135, %v141
    %v143 = vmul.f32 %v142, 1.442695
    %v144 = vpow.pop %v143
    %145 = vadd.xlane.f32.xlu0 %v144
    %v146 = vpop.xlane.xlu0 %145
    %v147 = vrcp.pop %v146
    %v148 = vmul.f32 %v147, 32.0
    %v149 = vmul.f32 %v144, %v148
    %v150 = vmul.f32 %v149, %v139
    %152 = vrot.lane.b32.xlu0 %v150, 96
    %v153 = vpop.permute.xlu0 %152
    %v155 = vadd.f32 %v150, %v153
    %156 = vrot.lane.b32.xlu0 %v150, 64
    %v157 = vpop.permute.xlu0 %156
    %v159 = vadd.f32 %v155, %v157
    %160 = vrot.lane.b32.xlu0 %v150, 32
    %v161 = vpop.permute.xlu0 %160
    %v163 = vadd.f32 %v159, %v161
    %164 = vst.msk [vmem:[#allocation7] sm:$0xff] %vm62, %v163
    // Predicated region
    $region22: #{tpu_custom_call.1} parent=1 // pred_check
      _
    $region23: #{tpu_custom_call.1} parent=1 // pred_check_branch
      %166 = sbr.rel (0) target = $region25
    $region24: #{tpu_custom_call.1} parent=1 // pred_region
      %s168 = ssub.s32 128, 128
      %169 = vsyncadd [#allocation4], %s168
      %s171 = sshll.u32 [#allocation7], 4
      %s172 = int_to_ptr.vmem [resolvable:$true] %s171
      %174 = dma.vmem_to_hbm [thread:$0]  %s172, 128, %s3, [#allocation4]
    $region25: #{tpu_custom_call.1} parent=1 // pred_fallthru
      _
    // Predicated region
    $region26: #{tpu_custom_call.1} parent=1 // pred_check
      _
    $region27: #{tpu_custom_call.1} parent=1 // pred_check_branch
      %176 = sbr.rel (0) target = $region29
    $region28: #{tpu_custom_call.1} parent=1 // pred_region
      %177 = dma.done [#allocation4], 128
    $region29: #{tpu_custom_call.1} parent=1 // pred_fallthru
      _
    %178 = vsyncpa [#allocation3], 1
    %179 = vsyncpa [#allocation6], 1
    %180 = vsyncpa [#allocation4], 1

</llo_original>
